<compile_context>
chip_gen: v5e
topology: v5e:2x2
jax: 0.10.0
libtpu: 0.0.40
codegen_flags: <defaults>
</compile_context>

<pallas_src>
import functools
from typing import NamedTuple

import jax
import jax.numpy as jnp
from jax.experimental import pallas as pl
from jax.experimental.pallas import tpu as pltpu


def _round_up(a: int, b: int) -> int:
    return (a + b - 1) // b * b


def _cdiv(a: int, b: int) -> int:
    return (a + b - 1) // b


def _pick_tile(dim: int, base: int, cap: int, min_tiles: int = 1) -> int:
    """Tile size <= cap, multiple of `base`, chosen to minimize padding waste.

    E.g. dim=300, base=16, cap=256 -> 2 tiles of 160 (pads to 320) instead of one
    256-tile padding to 512.
    """
    cap = max(base, cap // base * base)
    n_tiles = max(min_tiles, _cdiv(dim, cap))
    t = _round_up(_cdiv(dim, n_tiles), base)
    return min(t, cap)


def _tile_caps():
    """Generation-aware tile caps and VMEM ceiling."""
    try:
        vmem_cap = int(pltpu.get_tpu_info().vmem_capacity_bytes)
    except Exception:  # pragma: no cover - conservative fallback
        vmem_cap = 64 << 20
    if vmem_cap >= (96 << 20):
        # v5e / v6e: 128 MiB physical VMEM -> bigger tiles, bigger scoped limit.
        return dict(tm_max=512, tn_max=512, tk_max=2048, vmem_ceiling=100 << 20)
    # v7x: 64 MiB physical VMEM per TensorCore -> leave headroom.
    return dict(tm_max=256, tn_max=256, tk_max=1024, vmem_ceiling=48 << 20)


class ComplexParams(NamedTuple):
    w_packed: jax.Array  # (Kp, n_tiles * 2*tn) bf16, per-N-tile [real | imag] lane packing
    n_in: int
    n_out: int
    tn: int
    tk: int
    Kp: int
    Np: int


def prepare_complex_weights(weight, norm_val, *, n_out, learn_norm=False,
                            compute_dtype=jnp.bfloat16) -> ComplexParams:
    """One-time weight prep, hoisted out of the per-call forward path.

    weight: (2*n_out, n_in) torch-Linear-layout weight.
    Applies the optional set_to_norm_graph renormalization, splits real/imag,
    transposes to (K, N), pads to tile multiples, and packs each N-tile as
    [real_tile | imag_tile] along the lane axis so the kernel issues a single
    (tm, tk) @ (tk, 2*tn) MXU dot per grid step.
    """
    two_n_out, K = weight.shape
    assert two_n_out == 2 * n_out, (weight.shape, n_out)

    caps = _tile_caps()
    tn = _pick_tile(n_out, 128, caps["tn_max"], min_tiles=2 if n_out > 128 else 1)
    tk = _pick_tile(K, 128, caps["tk_max"])
    Kp = _round_up(K, tk)
    Np = _round_up(n_out, tn)

    w = weight.astype(jnp.float32)
    if learn_norm:
        # NOTE: no epsilon, matching the torch reference; an all-zero row yields NaN.
        norms = jnp.sqrt(jnp.sum(w * w, axis=1, keepdims=True))
        w = w / norms * norm_val

    wr = w[:n_out, :].T  # (K, N) real columns
    wi = w[n_out:, :].T  # (K, N) imag columns
    pad = ((0, Kp - K), (0, Np - n_out))
    wr = jnp.pad(wr, pad)
    wi = jnp.pad(wi, pad)

    n_tiles = Np // tn
    packed = jnp.stack([wr.reshape(Kp, n_tiles, tn),
                        wi.reshape(Kp, n_tiles, tn)], axis=2)
    packed = packed.reshape(Kp, n_tiles * 2 * tn).astype(compute_dtype)
    return ComplexParams(packed, K, n_out, tn, tk, Kp, Np)


def _complex_fwd_kernel(x_ref, w_ref, amp_ref, ph_ref, acc_ref):
    """Grid = (N tiles, M tiles, K reduction).

    x_ref:   (tm, tk)      bf16 input tile
    w_ref:   (tk, 2*tn)    bf16 packed [real_tile | imag_tile] weight block
    amp_ref/ph_ref: (tm, tn) output tiles in the caller's dtype
    acc_ref: (tm, 2*tn)    f32 VMEM scratch accumulator (resident across K axis)
    """
    k = pl.program_id(2)

    # Single fused MXU dot: lanes [0:tn] are real partials, [tn:2*tn] imag partials.
    partial = jnp.dot(x_ref[...], w_ref[...], preferred_element_type=jnp.float32)

    @pl.when(k == 0)
    def _():
        acc_ref[...] = partial

    @pl.when(k > 0)
    def _():
        acc_ref[...] += partial

    @pl.when(k == pl.num_programs(2) - 1)
    def _():
        tn = acc_ref.shape[1] // 2
        acc = acc_ref[...]
        real = acc[:, :tn]
        imag = acc[:, tn:]
        amp_ref[...] = jnp.sqrt(real * real + imag * imag).astype(amp_ref.dtype)
        # torch.atan2(real, imag) argument order kept deliberately (module spec).
        ph_ref[...] = jnp.arctan2(real, imag).astype(ph_ref.dtype)


def complex_forward(x, params: ComplexParams, *, compute_dtype=jnp.bfloat16):
    """Forward pass of the Complex CAE module (eval-mode dropout = identity).

    x: (B, n_in). Returns (amplitudes, phases), each (B, n_out), dtype of x.
    """
    M, K = x.shape
    assert K == params.n_in, (K, params.n_in)
    N, tn, tk, Kp, Np = params.n_out, params.tn, params.tk, params.Kp, params.Np
    caps = _tile_caps()

    # bf16 sublane packing -> tm rounded to 16. Prefer the largest tm that fits so the
    # weight stream (the dominant HBM operand) is re-read as few times as possible.
    tm = _pick_tile(M, 16, caps["tm_max"])
    Mp = _round_up(M, tm)

    x_p = x.astype(compute_dtype)
    if (Mp, Kp) != (M, K):
        x_p = jnp.pad(x_p, ((0, Mp - M), (0, Kp - K)))

    out_dtype = x.dtype
    cd_bytes = jnp.dtype(compute_dtype).itemsize
    od_bytes = jnp.dtype(out_dtype).itemsize

    # VMEM budget: double-buffered inputs + outputs, plus the f32 scratch accumulator.
    in_bytes = (tm * tk + tk * 2 * tn) * cd_bytes
    out_bytes = 2 * tm * tn * od_bytes
    scratch_bytes = tm * 2 * tn * 4
    vmem_limit = 2 * (in_bytes + out_bytes) + scratch_bytes + (4 << 20)
    vmem_limit = int(min(max(vmem_limit, 16 << 20), caps["vmem_ceiling"]))

    grid = (Np // tn, Mp // tm, Kp // tk)  # N first -> sharded across v7x TensorCores

    amp, ph = pl.pallas_call(
        _complex_fwd_kernel,
        out_shape=(jax.ShapeDtypeStruct((Mp, Np), out_dtype),
                   jax.ShapeDtypeStruct((Mp, Np), out_dtype)),
        grid_spec=pltpu.PrefetchScalarGridSpec(
            num_scalar_prefetch=0,
            grid=grid,
            in_specs=[
                pl.BlockSpec((tm, tk), lambda j, i, k: (i, k)),      # x tile
                pl.BlockSpec((tk, 2 * tn), lambda j, i, k: (k, j)),  # packed weight block
            ],
            out_specs=[
                pl.BlockSpec((tm, tn), lambda j, i, k: (i, j)),      # amplitudes
                pl.BlockSpec((tm, tn), lambda j, i, k: (i, j)),      # phases
            ],
            scratch_shapes=[pltpu.VMEM((tm, 2 * tn), jnp.float32)],
        ),
        compiler_params=pltpu.CompilerParams(
            dimension_semantics=("parallel", "parallel", "arbitrary"),
            vmem_limit_bytes=vmem_limit),
    )(x_p, params.w_packed)

    if (Mp, Np) != (M, N):
        amp = amp[:M, :N]
        ph = ph[:M, :N]
    return amp, ph


def _reference(x, weight, norm_val, *, n_out, learn_norm=False,
               compute_dtype=jnp.bfloat16):
    """Pure-JAX reference using the same bf16-input / f32-accumulate matmul."""
    w = weight.astype(jnp.float32)
    if learn_norm:
        norms = jnp.sqrt(jnp.sum(w * w, axis=1, keepdims=True))
        w = w / norms * norm_val
    out = jnp.dot(x.astype(compute_dtype), w.T.astype(compute_dtype),
                  preferred_element_type=jnp.float32)
    real, imag = out[:, :n_out], out[:, n_out:]
    return jnp.sqrt(real ** 2 + imag ** 2), jnp.arctan2(real, imag)


if __name__ == "__main__":
    # Small, deliberately non-tile-aligned shapes to exercise the padding path.
    B, n_in, n_out = 6, 200, 96

    key = jax.random.PRNGKey(0)
    kx, kw = jax.random.split(key)

    # Deterministic init mimicking nn.Linear default: U(-1/sqrt(n_in), 1/sqrt(n_in)).
    bound = 1.0 / (n_in ** 0.5)
    weight = jax.random.uniform(kw, (2 * n_out, n_in), jnp.float32,
                                minval=-bound, maxval=bound)
    x = jax.random.normal(kx, (B, n_in), jnp.float32)
    norm_val = jnp.float32(0.43)

    # learn_norm=False path (weight prep is a one-time cost, hoisted out of forward).
    params = prepare_complex_weights(weight, norm_val, n_out=n_out, learn_norm=False)
    amp, ph = complex_forward(x, params)
    amp = jax.block_until_ready(amp)
    ph = jax.block_until_ready(ph)
    amp_ref, ph_ref = _reference(x, weight, norm_val, n_out=n_out, learn_norm=False)
    assert amp.shape == (B, n_out) and ph.shape == (B, n_out)
    assert amp.dtype == x.dtype and ph.dtype == x.dtype
    assert jnp.allclose(amp, amp_ref, atol=5e-3, rtol=5e-3)
    assert jnp.allclose(ph, ph_ref, atol=5e-3, rtol=5e-3)

    # learn_norm=True path (row renormalization happens once in weight prep).
    params2 = prepare_complex_weights(weight, norm_val, n_out=n_out, learn_norm=True)
    amp2, ph2 = complex_forward(x, params2)
    amp2 = jax.block_until_ready(amp2)
    ph2 = jax.block_until_ready(ph2)
    amp2_ref, ph2_ref = _reference(x, weight, norm_val, n_out=n_out, learn_norm=True)
    assert jnp.allclose(amp2, amp2_ref, atol=5e-3, rtol=5e-3)
    assert jnp.allclose(ph2, ph2_ref, atol=5e-3, rtol=5e-3)

    print("KERNEL_OK")
</pallas_src>

<mosaic_0001>
module attributes {stable_mosaic.version = 11 : i64} {
  func.func @_complex_fwd_kernel(%arg0: i32, %arg1: i32, %arg2: i32, %arg3: memref<16x256xbf16, #tpu.memory_space<vmem>>, %arg4: memref<256x256xbf16, #tpu.memory_space<vmem>>, %arg5: memref<16x128xf32, #tpu.memory_space<vmem>>, %arg6: memref<16x128xf32, #tpu.memory_space<vmem>>, %arg7: memref<16x256xf32, #tpu.memory_space<vmem>>) attributes {dimension_semantics = [#tpu.dimension_semantics<parallel>, #tpu.dimension_semantics<parallel>, #tpu.dimension_semantics<arbitrary>], iteration_bounds = array<i64: 1, 1, 1>, scalar_prefetch = 0 : i64, scratch_operands = 1 : i64, tpu.core_type = #tpu.core_type<tc>, window_params = [{transform_indices = @transform_0, window_bounds = array<i64: 16, 256>}, {transform_indices = @transform_1, window_bounds = array<i64: 256, 256>}, {transform_indices = @transform_2, window_bounds = array<i64: 16, 128>}, {transform_indices = @transform_3, window_bounds = array<i64: 16, 128>}]} {
    %c0 = arith.constant 0 : index
    %c0_0 = arith.constant 0 : index
    %0 = vector.load %arg3[%c0, %c0_0] : memref<16x256xbf16, #tpu.memory_space<vmem>>, vector<16x256xbf16>
    %c0_1 = arith.constant 0 : index
    %c0_2 = arith.constant 0 : index
    %1 = vector.load %arg4[%c0_1, %c0_2] : memref<256x256xbf16, #tpu.memory_space<vmem>>, vector<256x256xbf16>
    %cst = arith.constant dense<0.000000e+00> : vector<16x256xf32>
    %2 = tpu.matmul %0, %1, %cst {dimension_numbers = #tpu.dot_dimension_numbers<[1], [0], [0], [1], [0, 0, 1, 1], [], []>} : vector<16x256xbf16>, vector<256x256xbf16>, vector<16x256xf32> -> vector<16x256xf32>
    %c0_i32 = arith.constant 0 : i32
    %3 = arith.cmpi eq, %arg2, %c0_i32 : i32
    %4 = arith.extui %3 : i1 to i32
    %c0_i32_3 = arith.constant 0 : i32
    %5 = arith.cmpi ne, %4, %c0_i32_3 : i32
    scf.if %5 {
      %c0_8 = arith.constant 0 : index
      %c0_9 = arith.constant 0 : index
      %12 = vector.load %arg7[%c0_8, %c0_9] : memref<16x256xf32, #tpu.memory_space<vmem>>, vector<16x256xf32>
      tpu.vector_store %arg7[%c0_8, %c0_9], %2 {strides = array<i32>} : memref<16x256xf32, #tpu.memory_space<vmem>>, vector<16x256xf32>,
    } else {
    }
    %c0_i32_4 = arith.constant 0 : i32
    %6 = arith.cmpi sgt, %arg2, %c0_i32_4 : i32
    %7 = arith.extui %6 : i1 to i32
    %c0_i32_5 = arith.constant 0 : i32
    %8 = arith.cmpi ne, %7, %c0_i32_5 : i32
    scf.if %8 {
      %c0_8 = arith.constant 0 : index
      %c0_9 = arith.constant 0 : index
      %12 = vector.load %arg7[%c0_8, %c0_9] : memref<16x256xf32, #tpu.memory_space<vmem>>, vector<16x256xf32>
      %13 = arith.addf %12, %2 : vector<16x256xf32>
      %c0_10 = arith.constant 0 : index
      %c0_11 = arith.constant 0 : index
      %14 = vector.load %arg7[%c0_10, %c0_11] : memref<16x256xf32, #tpu.memory_space<vmem>>, vector<16x256xf32>
      tpu.vector_store %arg7[%c0_10, %c0_11], %13 {strides = array<i32>} : memref<16x256xf32, #tpu.memory_space<vmem>>, vector<16x256xf32>,
    } else {
    }
    %c0_i32_6 = arith.constant 0 : i32
    %9 = arith.cmpi eq, %arg2, %c0_i32_6 : i32
    %10 = arith.extui %9 : i1 to i32
    %c0_i32_7 = arith.constant 0 : i32
    %11 = arith.cmpi ne, %10, %c0_i32_7 : i32
    scf.if %11 {
      %c0_8 = arith.constant 0 : index
      %c0_9 = arith.constant 0 : index
      %12 = vector.load %arg7[%c0_8, %c0_9] : memref<16x256xf32, #tpu.memory_space<vmem>>, vector<16x256xf32>
      %13 = vector.extract_strided_slice %12 {offsets = [0, 0], sizes = [16, 128], strides = [1, 1]} : vector<16x256xf32> to vector<16x128xf32>
      %14 = vector.extract_strided_slice %12 {offsets = [0, 128], sizes = [16, 128], strides = [1, 1]} : vector<16x256xf32> to vector<16x128xf32>
      %15 = arith.mulf %13, %13 : vector<16x128xf32>
      %16 = arith.mulf %14, %14 : vector<16x128xf32>
      %17 = arith.addf %15, %16 : vector<16x128xf32>
      %18 = math.sqrt %17 : vector<16x128xf32>
      %c0_10 = arith.constant 0 : index
      %c0_11 = arith.constant 0 : index
      %19 = vector.load %arg5[%c0_10, %c0_11] : memref<16x128xf32, #tpu.memory_space<vmem>>, vector<16x128xf32>
      tpu.vector_store %arg5[%c0_10, %c0_11], %18 {strides = array<i32>} : memref<16x128xf32, #tpu.memory_space<vmem>>, vector<16x128xf32>,
      %20 = math.atan2 %13, %14 : vector<16x128xf32>
      %c0_12 = arith.constant 0 : index
      %c0_13 = arith.constant 0 : index
      %21 = vector.load %arg6[%c0_12, %c0_13] : memref<16x128xf32, #tpu.memory_space<vmem>>, vector<16x128xf32>
      tpu.vector_store %arg6[%c0_12, %c0_13], %20 {strides = array<i32>} : memref<16x128xf32, #tpu.memory_space<vmem>>, vector<16x128xf32>,
    } else {
    }
    return
  }
  func.func @transform_0(%arg0: i32, %arg1: i32, %arg2: i32) -> (i32, i32) {
    %c0_i32 = arith.constant 0 : i32
    return %arg1, %arg2 : i32, i32
  }
  func.func @transform_1(%arg0: i32, %arg1: i32, %arg2: i32) -> (i32, i32) {
    %c0_i32 = arith.constant 0 : i32
    return %arg2, %arg0 : i32, i32
  }
  func.func @transform_2(%arg0: i32, %arg1: i32, %arg2: i32) -> (i32, i32) {
    %c0_i32 = arith.constant 0 : i32
    return %arg1, %arg0 : i32, i32
  }
  func.func @transform_3(%arg0: i32, %arg1: i32, %arg2: i32) -> (i32, i32) {
    %c0_i32 = arith.constant 0 : i32
    return %arg1, %arg0 : i32, i32
  }
}

</mosaic_0001>

<llo_original>
// kernel: tpu_custom_call.1
$region0: #{tpu_custom_call.1}
  #allocation0 [shape = 'u32[]', space=smem, size = 0x4, offset = 0x4, fixed_abs, tag = 'smem constant byte address 0x4 - core index']
  #allocation1 [shape = 'u32[72,128]{1,0:T(1,128)}', space=vmem, size = 0x9000, scoped, tag = 'internal scratch']
  #allocation2 [shape = 'f32[16,256]{1,0:T(8,128)}', space=vmem, size = 0x4000, scoped, tag = 'scratch operand']
  %s0 = inlined_call_operand.hbm [shape: bf16[16,256], index: 0, kind: input, shape index: {}]
  %s1 = inlined_call_operand.hbm [shape: bf16[256,256], index: 1, kind: input, shape index: {}]
  %s2 = inlined_call_operand.hbm [shape: f32[16,128], index: 2, kind: output, shape index: {0}]
  %s3 = inlined_call_operand.hbm [shape: f32[16,128], index: 3, kind: output, shape index: {1}]
  %4 = xla_tuple %s2, %s3
  %s5 = sld [smem:[#allocation0]]
  $region46: #{tpu_custom_call.1} parent=0
    _
  %s7 = ssub.s32 1, %s5
  %s8 = scalar_select 0, %s7, %s5
  $region1: #{tpu_custom_call.1} parent=0
    #allocation3 [shape = 'u8[8192]{0}', space=vmem, size = 0x2000, scoped, tag = 'input window, operand 0, single buffered']
    #allocation4 [shape = 's32[1]{0}', space=sflag, size = 0x4, scoped, tag = 'scoped memory for tpu_custom_call.1']
    #allocation5 [shape = 's32[1]{0}', space=sflag, size = 0x4, scoped, tag = 'scoped memory for tpu_custom_call.1']
    #allocation6 [shape = 'u8[131072]{0}', space=vmem, size = 0x20000, scoped, tag = 'input window, operand 1, single buffered']
    #allocation7 [shape = 's32[1]{0}', space=sflag, size = 0x4, scoped, tag = 'scoped memory for tpu_custom_call.1']
    #allocation8 [shape = 'u8[8192]{0}', space=vmem, size = 0x2000, scoped, tag = 'output window, operand 0, single buffered']
    #allocation9 [shape = 'u8[8192]{0}', space=vmem, size = 0x2000, scoped, tag = 'output window, operand 1, single buffered']
    #allocation10 [shape = 's32[1]{0}', space=sflag, size = 0x4, scoped, tag = 'scoped memory for tpu_custom_call.1']
    %9 = vsyncpa [#allocation4], 0
    %10 = vsyncpa [#allocation7], 0
    %11 = vsyncpa [#allocation5], 0
    %12 = vsyncpa [#allocation10], 0
    // Predicated region
    $region2: #{tpu_custom_call.1} parent=1 // pred_check
      _
    $region3: #{tpu_custom_call.1} parent=1 // pred_check_branch
      %14 = sbr.rel (0) target = $region5
    $region4: #{tpu_custom_call.1} parent=1 // pred_region
      %16 = vsyncadd [#allocation4], 0
      %s17 = sshll.u32 %s0, 4
      %s18 = int_to_ptr.hbm [resolvable:$true] %s17
      %s19 = sshll.u32 [#allocation3], 4
      %s20 = int_to_ptr.vmem [resolvable:$true] %s19
      %25 = dma.hbm_to_vmem [thread:$0]  %s18, 256, %s20, [#allocation4], 128, 128, 8
    $region5: #{tpu_custom_call.1} parent=1 // pred_fallthru
      _
    // Predicated region
    $region6: #{tpu_custom_call.1} parent=1 // pred_check
      _
    $region7: #{tpu_custom_call.1} parent=1 // pred_check_branch
      %27 = sbr.rel (0) target = $region9
    $region8: #{tpu_custom_call.1} parent=1 // pred_region
      %29 = vsyncadd [#allocation7], 0
      %s30 = sshll.u32 %s1, 4
      %s31 = int_to_ptr.hbm [resolvable:$true] %s30
      %s32 = sshll.u32 [#allocation6], 4
      %s33 = int_to_ptr.vmem [resolvable:$true] %s32
      %38 = dma.hbm_to_vmem [thread:$0]  %s31, 4096, %s33, [#allocation7], 128, 128, 8
    $region9: #{tpu_custom_call.1} parent=1 // pred_fallthru
      _
    // Predicated region
    $region10: #{tpu_custom_call.1} parent=1 // pred_check
      _
    $region11: #{tpu_custom_call.1} parent=1 // pred_check_branch
      %40 = sbr.rel (0) target = $region13
    $region12: #{tpu_custom_call.1} parent=1 // pred_region
      %42 = dma.done [#allocation4], 256
    $region13: #{tpu_custom_call.1} parent=1 // pred_fallthru
      _
    // Predicated region
    $region14: #{tpu_custom_call.1} parent=1 // pred_check
      _
    $region15: #{tpu_custom_call.1} parent=1 // pred_check_branch
      %44 = sbr.rel (0) target = $region17
    $region16: #{tpu_custom_call.1} parent=1 // pred_region
      %46 = dma.done [#allocation7], 4096
    $region17: #{tpu_custom_call.1} parent=1 // pred_fallthru
      _
    %v47 = vld [vmem:[#allocation3] sm:$0xff]
    %v48 = vld [vmem:[#allocation3 + $0x8] sm:$0xff]
    %v49 = vld [vmem:[#allocation6] sm:$0xff]
    %v50 = vld [vmem:[#allocation6 + $0x8] sm:$0xff]
    %v51 = vld [vmem:[#allocation6 + $0x10] sm:$0xff]
    %v52 = vld [vmem:[#allocation6 + $0x18] sm:$0xff]
    %v53 = vld [vmem:[#allocation6 + $0x20] sm:$0xff]
    %v54 = vld [vmem:[#allocation6 + $0x28] sm:$0xff]
    %v55 = vld [vmem:[#allocation6 + $0x30] sm:$0xff]
    %v56 = vld [vmem:[#allocation6 + $0x38] sm:$0xff]
    %v57 = vld [vmem:[#allocation6 + $0x40] sm:$0xff]
    %v58 = vld [vmem:[#allocation6 + $0x48] sm:$0xff]
    %v59 = vld [vmem:[#allocation6 + $0x50] sm:$0xff]
    %v60 = vld [vmem:[#allocation6 + $0x58] sm:$0xff]
    %v61 = vld [vmem:[#allocation6 + $0x60] sm:$0xff]
    %v62 = vld [vmem:[#allocation6 + $0x68] sm:$0xff]
    %v63 = vld [vmem:[#allocation6 + $0x70] sm:$0xff]
    %v64 = vld [vmem:[#allocation6 + $0x78] sm:$0xff]
    %v65 = vld [vmem:[#allocation6 + $0x80] sm:$0xff]
    %v66 = vld [vmem:[#allocation6 + $0x88] sm:$0xff]
    %v67 = vld [vmem:[#allocation6 + $0x90] sm:$0xff]
    %v68 = vld [vmem:[#allocation6 + $0x98] sm:$0xff]
    %v69 = vld [vmem:[#allocation6 + $0xa0] sm:$0xff]
    %v70 = vld [vmem:[#allocation6 + $0xa8] sm:$0xff]
    %v71 = vld [vmem:[#allocation6 + $0xb0] sm:$0xff]
    %v72 = vld [vmem:[#allocation6 + $0xb8] sm:$0xff]
    %v73 = vld [vmem:[#allocation6 + $0xc0] sm:$0xff]
    %v74 = vld [vmem:[#allocation6 + $0xc8] sm:$0xff]
    %v75 = vld [vmem:[#allocation6 + $0xd0] sm:$0xff]
    %v76 = vld [vmem:[#allocation6 + $0xd8] sm:$0xff]
    %v77 = vld [vmem:[#allocation6 + $0xe0] sm:$0xff]
    %v78 = vld [vmem:[#allocation6 + $0xe8] sm:$0xff]
    %v79 = vld [vmem:[#allocation6 + $0xf0] sm:$0xff]
    %v80 = vld [vmem:[#allocation6 + $0xf8] sm:$0xff]
    %v83 = vunpack.c.l.b16 %v47
    %v84 = vunpack.c.h.b16 %v47
    %v85 = vunpack.c.l.b16 %v48
    %v86 = vunpack.c.h.b16 %v48
    %v87 = vpack.c.b16 %v85, %v83
    %v88 = vpack.c.b16 %v86, %v84
    %v123 = vunpack.c.l.b16 %v49
    %v124 = vunpack.c.h.b16 %v49
    %v125 = vunpack.c.l.b16 %v50
    %v126 = vunpack.c.h.b16 %v50
    %v127 = vunpack.c.l.b16 %v51
    %v128 = vunpack.c.h.b16 %v51
    %v129 = vunpack.c.l.b16 %v52
    %v130 = vunpack.c.h.b16 %v52
    %v131 = vunpack.c.l.b16 %v53
    %v132 = vunpack.c.h.b16 %v53
    %v133 = vunpack.c.l.b16 %v54
    %v134 = vunpack.c.h.b16 %v54
    %v135 = vunpack.c.l.b16 %v55
    %v136 = vunpack.c.h.b16 %v55
    %v137 = vunpack.c.l.b16 %v56
    %v138 = vunpack.c.h.b16 %v56
    %v139 = vunpack.c.l.b16 %v57
    %v140 = vunpack.c.h.b16 %v57
    %v141 = vunpack.c.l.b16 %v58
    %v142 = vunpack.c.h.b16 %v58
    %v143 = vunpack.c.l.b16 %v59
    %v144 = vunpack.c.h.b16 %v59
    %v145 = vunpack.c.l.b16 %v60
    %v146 = vunpack.c.h.b16 %v60
    %v147 = vunpack.c.l.b16 %v61
    %v148 = vunpack.c.h.b16 %v61
    %v149 = vunpack.c.l.b16 %v62
    %v150 = vunpack.c.h.b16 %v62
    %v151 = vunpack.c.l.b16 %v63
    %v152 = vunpack.c.h.b16 %v63
    %v153 = vunpack.c.l.b16 %v64
    %v154 = vunpack.c.h.b16 %v64
    %v155 = vunpack.c.l.b16 %v65
    %v156 = vunpack.c.h.b16 %v65
    %v157 = vunpack.c.l.b16 %v66
    %v158 = vunpack.c.h.b16 %v66
    %v159 = vunpack.c.l.b16 %v67
    %v160 = vunpack.c.h.b16 %v67
    %v161 = vunpack.c.l.b16 %v68
    %v162 = vunpack.c.h.b16 %v68
    %v163 = vunpack.c.l.b16 %v69
    %v164 = vunpack.c.h.b16 %v69
    %v165 = vunpack.c.l.b16 %v70
    %v166 = vunpack.c.h.b16 %v70
    %v167 = vunpack.c.l.b16 %v71
    %v168 = vunpack.c.h.b16 %v71
    %v169 = vunpack.c.l.b16 %v72
    %v170 = vunpack.c.h.b16 %v72
    %v171 = vunpack.c.l.b16 %v73
    %v172 = vunpack.c.h.b16 %v73
    %v173 = vunpack.c.l.b16 %v74
    %v174 = vunpack.c.h.b16 %v74
    %v175 = vunpack.c.l.b16 %v75
    %v176 = vunpack.c.h.b16 %v75
    %v177 = vunpack.c.l.b16 %v76
    %v178 = vunpack.c.h.b16 %v76
    %v179 = vunpack.c.l.b16 %v77
    %v180 = vunpack.c.h.b16 %v77
    %v181 = vunpack.c.l.b16 %v78
    %v182 = vunpack.c.h.b16 %v78
    %v183 = vunpack.c.l.b16 %v79
    %v184 = vunpack.c.h.b16 %v79
    %v185 = vunpack.c.l.b16 %v80
    %v186 = vunpack.c.h.b16 %v80
    %v187 = vpack.c.b16 %v125, %v123
    %v188 = vpack.c.b16 %v126, %v124
    %v189 = vpack.c.b16 %v129, %v127
    %v190 = vpack.c.b16 %v130, %v128
    %v191 = vpack.c.b16 %v133, %v131
    %v192 = vpack.c.b16 %v134, %v132
    %v193 = vpack.c.b16 %v137, %v135
    %v194 = vpack.c.b16 %v138, %v136
    %v195 = vpack.c.b16 %v141, %v139
    %v196 = vpack.c.b16 %v142, %v140
    %v197 = vpack.c.b16 %v145, %v143
    %v198 = vpack.c.b16 %v146, %v144
    %v199 = vpack.c.b16 %v149, %v147
    %v200 = vpack.c.b16 %v150, %v148
    %v201 = vpack.c.b16 %v153, %v151
    %v202 = vpack.c.b16 %v154, %v152
    %v203 = vpack.c.b16 %v157, %v155
    %v204 = vpack.c.b16 %v158, %v156
    %v205 = vpack.c.b16 %v161, %v159
    %v206 = vpack.c.b16 %v162, %v160
    %v207 = vpack.c.b16 %v165, %v163
    %v208 = vpack.c.b16 %v166, %v164
    %v209 = vpack.c.b16 %v169, %v167
    %v210 = vpack.c.b16 %v170, %v168
    %v211 = vpack.c.b16 %v173, %v171
    %v212 = vpack.c.b16 %v174, %v172
    %v213 = vpack.c.b16 %v177, %v175
    %v214 = vpack.c.b16 %v178, %v176
    %v215 = vpack.c.b16 %v181, %v179
    %v216 = vpack.c.b16 %v182, %v180
    %v217 = vpack.c.b16 %v185, %v183
    %v218 = vpack.c.b16 %v186, %v184
    %251 = vmatpush.bf16.msra.mxu0 %v201
    %252 = vmatpush.bf16.msra.mxu0 %v199
    %253 = vmatpush.bf16.msra.mxu0 %v197
    %254 = vmatpush.bf16.msra.mxu0 %v195
    %255 = vmatpush.bf16.msra.mxu0 %v193
    %256 = vmatpush.bf16.msra.mxu0 %v191
    %257 = vmatpush.bf16.msra.mxu0 %v189
    %258 = vmatpush.bf16.msra.mxu0 %v187
    %259 = vmatmul.bf16.gmra.mxu0 %v87
    %v260 = vpop.f32.mrf.mxu0
    %v261 = vadd.f32 0.0, %v260
    %v262 = vpop.f32.mrf.mxu0
    %v263 = vadd.f32 0.0, %v262
    %264 = vdwg.mxu0
    %265 = vmatpush.bf16.msra.mxu0 %v217
    %266 = vmatpush.bf16.msra.mxu0 %v215
    %267 = vmatpush.bf16.msra.mxu0 %v213
    %268 = vmatpush.bf16.msra.mxu0 %v211
    %269 = vmatpush.bf16.msra.mxu0 %v209
    %270 = vmatpush.bf16.msra.mxu0 %v207
    %271 = vmatpush.bf16.msra.mxu0 %v205
    %272 = vmatpush.bf16.msra.mxu0 %v203
    %273 = vmatmul.bf16.gmra.mxu0 %v88
    %v274 = vpop.f32.mrf.mxu0
    %v275 = vadd.f32 %v261, %v274
    %v276 = vpop.f32.mrf.mxu0
    %v277 = vadd.f32 %v263, %v276
    %278 = vdwg.mxu0
    %279 = vmatpush.bf16.msra.mxu0 %v202
    %280 = vmatpush.bf16.msra.mxu0 %v200
    %281 = vmatpush.bf16.msra.mxu0 %v198
    %282 = vmatpush.bf16.msra.mxu0 %v196
    %283 = vmatpush.bf16.msra.mxu0 %v194
    %284 = vmatpush.bf16.msra.mxu0 %v192
    %285 = vmatpush.bf16.msra.mxu0 %v190
    %286 = vmatpush.bf16.msra.mxu0 %v188
    %287 = vmatmul.bf16.gmra.mxu0 %v87
    %v288 = vpop.f32.mrf.mxu0
    %v289 = vadd.f32 0.0, %v288
    %v290 = vpop.f32.mrf.mxu0
    %v291 = vadd.f32 0.0, %v290
    %292 = vdwg.mxu0
    %293 = vmatpush.bf16.msra.mxu0 %v218
    %294 = vmatpush.bf16.msra.mxu0 %v216
    %295 = vmatpush.bf16.msra.mxu0 %v214
    %296 = vmatpush.bf16.msra.mxu0 %v212
    %297 = vmatpush.bf16.msra.mxu0 %v210
    %298 = vmatpush.bf16.msra.mxu0 %v208
    %299 = vmatpush.bf16.msra.mxu0 %v206
    %300 = vmatpush.bf16.msra.mxu0 %v204
    %301 = vmatmul.bf16.gmra.mxu0 %v88
    %v302 = vpop.f32.mrf.mxu0
    %v303 = vadd.f32 %v289, %v302
    %v304 = vpop.f32.mrf.mxu0
    %v305 = vadd.f32 %v291, %v304
    %306 = vdwg.mxu0
    %p307 = scmp.eq.s32.totalorder 0, 0
    // Predicated region
    $region18: #{tpu_custom_call.1} parent=1 // pred_check
      %p308 = pneg %p307
    $region19: #{tpu_custom_call.1} parent=1 // pred_check_branch
      %310 = sbr.rel (%p308) target = $region21
    $region20: #{tpu_custom_call.1} parent=1 // pred_region
      %311 = vst [vmem:[#allocation2] sm:$0xff] %v275
      %312 = vst [vmem:[#allocation2 + $0x8] sm:$0xff] %v303
      %313 = vst [vmem:[#allocation2 + $0x10] sm:$0xff] %v277
      %314 = vst [vmem:[#allocation2 + $0x18] sm:$0xff] %v305
    $region21: #{tpu_custom_call.1} parent=1 // pred_fallthru
      _
    %p315 = scmp.gt.s32.totalorder 0, 0
    // Predicated region
    $region22: #{tpu_custom_call.1} parent=1 // pred_check
      %p316 = pneg %p315
    $region23: #{tpu_custom_call.1} parent=1 // pred_check_branch
      %318 = sbr.rel (%p316) target = $region25
    $region24: #{tpu_custom_call.1} parent=1 // pred_region
      %v319 = vld [vmem:[#allocation2] sm:$0xff]
      %v320 = vld [vmem:[#allocation2 + $0x8] sm:$0xff]
      %v321 = vld [vmem:[#allocation2 + $0x10] sm:$0xff]
      %v322 = vld [vmem:[#allocation2 + $0x18] sm:$0xff]
      %v323 = vadd.f32 %v319, %v275
      %v324 = vadd.f32 %v320, %v303
      %v325 = vadd.f32 %v321, %v277
      %v326 = vadd.f32 %v322, %v305
      %327 = vst [vmem:[#allocation2] sm:$0xff] %v323
      %328 = vst [vmem:[#allocation2 + $0x8] sm:$0xff] %v324
      %329 = vst [vmem:[#allocation2 + $0x10] sm:$0xff] %v325
      %330 = vst [vmem:[#allocation2 + $0x18] sm:$0xff] %v326
    $region25: #{tpu_custom_call.1} parent=1 // pred_fallthru
      _
    // Predicated region
    $region26: #{tpu_custom_call.1} parent=1 // pred_check
      %p331 = pneg %p307
    $region27: #{tpu_custom_call.1} parent=1 // pred_check_branch
      %333 = sbr.rel (%p331) target = $region29
    $region28: #{tpu_custom_call.1} parent=1 // pred_region
      %v334 = vld [vmem:[#allocation2] sm:$0xff]
      %v335 = vld [vmem:[#allocation2 + $0x8] sm:$0xff]
      %v336 = vld [vmem:[#allocation2 + $0x10] sm:$0xff]
      %v337 = vld [vmem:[#allocation2 + $0x18] sm:$0xff]
      %v338 = vmul.f32 %v334, %v334
      %v339 = vmul.f32 %v336, %v336
      %v340 = vmul.f32 %v335, %v335
      %v341 = vmul.f32 %v337, %v337
      %v342 = vadd.f32 %v338, %v340
      %v343 = vadd.f32 %v339, %v341
      %v344 = vrsqrt.pop %v342
      %v345 = vmul.f32 %v344, %v342
      %v346 = vmul.f32 %v345, %v344
      %v347 = vmul.f32 0.5, %v346
      %v348 = vsub.f32 1.5, %v347
      %v349 = vmul.f32 %v344, %v348
      %v350 = vmul.f32 %v342, %v349
      %vm351 = vcmp.eq.f32.partialorder %v342, inf
      %v352 = vsel %vm351, %v342, %v350
      %vm353 = vcmp.eq.f32.partialorder %v342, 0.0
      %v354 = vand.u32 %v342, 2147483648
      %v355 = vsel %vm353, %v354, %v352
      %v356 = vrsqrt.pop %v343
      %v357 = vmul.f32 %v356, %v343
      %v358 = vmul.f32 %v357, %v356
      %v359 = vmul.f32 0.5, %v358
      %v360 = vsub.f32 1.5, %v359
      %v361 = vmul.f32 %v356, %v360
      %v362 = vmul.f32 %v343, %v361
      %vm363 = vcmp.eq.f32.partialorder %v343, inf
      %v364 = vsel %vm363, %v343, %v362
      %vm365 = vcmp.eq.f32.partialorder %v343, 0.0
      %v366 = vand.u32 %v343, 2147483648
      %v367 = vsel %vm365, %v366, %v364
      %368 = vst [vmem:[#allocation8] sm:$0xff] %v355
      %369 = vst [vmem:[#allocation8 + $0x8] sm:$0xff] %v367
      %v370 = vand.u32 2147483647, %v335
      %v371 = vand.u32 2147483647, %v334
      %v372 = vmin.f32 %v370, %v371
      %v373 = vmax.f32 %v370, %v371
      %v374 = vrcp.pop %v373
      %v375 = vmul.f32 %v373, %v374
      %v376 = vsub.f32 1.0, %v375
      %v377 = vmul.f32 %v374, %v376
      %v378 = vadd.f32 %v374, %v377
      %vm379 = vweird.f32 %v373
      %vm380 = vweird.f32 %v374
      %vm381 = vmor %vm379, %vm380
      %v382 = vsel %vm381, %v374, %v378
      %v383 = vand.u32 2147483647, %v373
      %vm384 = vcmp.eq.f32.partialorder %v383, 8.507059e+37
      %v385 = vand.u32 %v373, 2147483648
      %v386 = vor.u32 1.1754944e-38, %v385
      %v387 = vsel %vm384, %v386, %v382
      %v388 = vmul.f32 %v372, %v387
      %v389 = vmul.f32 %v388, %v388
      %v390 = vmul.f32 0.002785687, %v389
      %v391 = vadd.f32 %v390, -0.015866
      %v392 = vmul.f32 %v391, %v389
      %v393 = vadd.f32 %v392, 0.04247222
      %v394 = vmul.f32 %v393, %v389
      %v395 = vadd.f32 %v394, -0.074975304
      %v396 = vmul.f32 %v395, %v389
      %v397 = vadd.f32 %v396, 0.1064488
      %v398 = vmul.f32 %v397, %v389
      %v399 = vadd.f32 %v398, -0.14207031
      %v400 = vmul.f32 %v399, %v389
      %v401 = vadd.f32 %v400, 0.19993454
      %v402 = vmul.f32 %v401, %v389
      %v403 = vadd.f32 %v402, -0.33333147
      %v404 = vmul.f32 %v403, %v389
      %v405 = vmul.f32 %v404, %v388
      %v406 = vadd.f32 %v405, %v388
      %vm407 = vcmp.gt.f32.partialorder %v371, %v370
      %v408 = vsub.f32 1.5707964, %v406
      %v409 = vsel %vm407, %v408, %v406
      %vm410 = vcmp.lt.f32.partialorder %v335, 0.0
      %v411 = vsub.f32 3.1415927, %v409
      %v412 = vsel %vm410, %v411, %v409
      %vm413 = vcmp.lt.s32.totalorder %v335, 0
      %v414 = vsel %vm413, 3.1415927, 0.0
      %vm415 = vcmp.eq.f32.partialorder %v334, 0.0
      %v416 = vsel %vm415, %v414, %v412
      %vm417 = vcmp.ne.f32.partialorder %v335, %v335
      %vm418 = vcmp.ne.f32.partialorder %v334, %v334
      %vm419 = vmor %vm417, %vm418
      %v420 = vsel %vm419, nan, %v416
      %vm421 = vcmp.lt.f32.partialorder %v335, 0.0
      %v422 = vsel %vm421, 2.3561945, 0.7853982
      %vm423 = vcmp.eq.s32.totalorder %v370, inf
      %vm424 = vcmp.eq.s32.totalorder %v371, inf
      %vm425 = vmand %vm423, %vm424
      %v426 = vsel %vm425, %v422, %v420
      %v427 = vand.u32 2147483647, %v426
      %v428 = vand.u32 %v334, 2147483648
      %v429 = vor.u32 %v427, %v428
      %v430 = vand.u32 2147483647, %v337
      %v431 = vand.u32 2147483647, %v336
      %v432 = vmin.f32 %v430, %v431
      %v433 = vmax.f32 %v430, %v431
      %v434 = vrcp.pop %v433
      %v435 = vmul.f32 %v433, %v434
      %v436 = vsub.f32 1.0, %v435
      %v437 = vmul.f32 %v434, %v436
      %v438 = vadd.f32 %v434, %v437
      %vm439 = vweird.f32 %v433
      %vm440 = vweird.f32 %v434
      %vm441 = vmor %vm439, %vm440
      %v442 = vsel %vm441, %v434, %v438
      %v443 = vand.u32 2147483647, %v433
      %vm444 = vcmp.eq.f32.partialorder %v443, 8.507059e+37
      %v445 = vand.u32 %v433, 2147483648
      %v446 = vor.u32 1.1754944e-38, %v445
      %v447 = vsel %vm444, %v446, %v442
      %v448 = vmul.f32 %v432, %v447
      %v449 = vmul.f32 %v448, %v448
      %v450 = vmul.f32 0.002785687, %v449
      %v451 = vadd.f32 %v450, -0.015866
      %v452 = vmul.f32 %v451, %v449
      %v453 = vadd.f32 %v452, 0.04247222
      %v454 = vmul.f32 %v453, %v449
      %v455 = vadd.f32 %v454, -0.074975304
      %v456 = vmul.f32 %v455, %v449
      %v457 = vadd.f32 %v456, 0.1064488
      %v458 = vmul.f32 %v457, %v449
      %v459 = vadd.f32 %v458, -0.14207031
      %v460 = vmul.f32 %v459, %v449
      %v461 = vadd.f32 %v460, 0.19993454
      %v462 = vmul.f32 %v461, %v449
      %v463 = vadd.f32 %v462, -0.33333147
      %v464 = vmul.f32 %v463, %v449
      %v465 = vmul.f32 %v464, %v448
      %v466 = vadd.f32 %v465, %v448
      %vm467 = vcmp.gt.f32.partialorder %v431, %v430
      %v468 = vsub.f32 1.5707964, %v466
      %v469 = vsel %vm467, %v468, %v466
      %vm470 = vcmp.lt.f32.partialorder %v337, 0.0
      %v471 = vsub.f32 3.1415927, %v469
      %v472 = vsel %vm470, %v471, %v469
      %vm473 = vcmp.lt.s32.totalorder %v337, 0
      %v474 = vsel %vm473, 3.1415927, 0.0
      %vm475 = vcmp.eq.f32.partialorder %v336, 0.0
      %v476 = vsel %vm475, %v474, %v472
      %vm477 = vcmp.ne.f32.partialorder %v337, %v337
      %vm478 = vcmp.ne.f32.partialorder %v336, %v336
      %vm479 = vmor %vm477, %vm478
      %v480 = vsel %vm479, nan, %v476
      %vm481 = vcmp.lt.f32.partialorder %v337, 0.0
      %v482 = vsel %vm481, 2.3561945, 0.7853982
      %vm483 = vcmp.eq.s32.totalorder %v430, inf
      %vm484 = vcmp.eq.s32.totalorder %v431, inf
      %vm485 = vmand %vm483, %vm484
      %v486 = vsel %vm485, %v482, %v480
      %v487 = vand.u32 2147483647, %v486
      %v488 = vand.u32 %v336, 2147483648
      %v489 = vor.u32 %v487, %v488
      %490 = vst [vmem:[#allocation9] sm:$0xff] %v429
      %491 = vst [vmem:[#allocation9 + $0x8] sm:$0xff] %v489
    $region29: #{tpu_custom_call.1} parent=1 // pred_fallthru
      _
    // Predicated region
    $region30: #{tpu_custom_call.1} parent=1 // pred_check
      _
    $region31: #{tpu_custom_call.1} parent=1 // pred_check_branch
      %493 = sbr.rel (0) target = $region33
    $region32: #{tpu_custom_call.1} parent=1 // pred_region
      %495 = vsyncadd [#allocation5], 0
      %s496 = sshll.u32 [#allocation8], 4
      %s497 = int_to_ptr.vmem [resolvable:$true] %s496
      %s498 = sshll.u32 %s2, 4
      %s499 = int_to_ptr.hbm [resolvable:$true] %s498
      %504 = dma.vmem_to_hbm [thread:$0]  %s497, 256, %s499, [#allocation5], 128, 128, 8
    $region33: #{tpu_custom_call.1} parent=1 // pred_fallthru
      _
    // Predicated region
    $region34: #{tpu_custom_call.1} parent=1 // pred_check
      _
    $region35: #{tpu_custom_call.1} parent=1 // pred_check_branch
      %506 = sbr.rel (0) target = $region37
    $region36: #{tpu_custom_call.1} parent=1 // pred_region
      %508 = vsyncadd [#allocation10], 0
      %s509 = sshll.u32 [#allocation9], 4
      %s510 = int_to_ptr.vmem [resolvable:$true] %s509
      %s511 = sshll.u32 %s3, 4
      %s512 = int_to_ptr.hbm [resolvable:$true] %s511
      %517 = dma.vmem_to_hbm [thread:$0]  %s510, 256, %s512, [#allocation10], 128, 128, 8
    $region37: #{tpu_custom_call.1} parent=1 // pred_fallthru
      _
    // Predicated region
    $region38: #{tpu_custom_call.1} parent=1 // pred_check
      _
    $region39: #{tpu_custom_call.1} parent=1 // pred_check_branch
      %519 = sbr.rel (0) target = $region41
    $region40: #{tpu_custom_call.1} parent=1 // pred_region
      %521 = dma.done [#allocation5], 256
    $region41: #{tpu_custom_call.1} parent=1 // pred_fallthru
      _
    // Predicated region
    $region42: #{tpu_custom_call.1} parent=1 // pred_check
      _
    $region43: #{tpu_custom_call.1} parent=1 // pred_check_branch
      %523 = sbr.rel (0) target = $region45
    $region44: #{tpu_custom_call.1} parent=1 // pred_region
      %525 = dma.done [#allocation10], 256
    $region45: #{tpu_custom_call.1} parent=1 // pred_fallthru
      _
    %526 = vsyncpa [#allocation4], 1
    %527 = vsyncpa [#allocation7], 1
    %528 = vsyncpa [#allocation5], 1
    %529 = vsyncpa [#allocation10], 1

</llo_original>
